<compile_context>
chip_gen: v5e
topology: v5e:2x2
jax: 0.10.0
libtpu: 0.0.40
codegen_flags: <defaults>
</compile_context>

<pallas_src>
import math

import jax
import jax.numpy as jnp
from jax.experimental import pallas as pl
from jax.experimental.pallas import tpu as pltpu


def _conv1x1_kernel(x_ref, w_ref, b_ref, o_ref):
    # x_ref: (C_in, tt)   activations for one (batch, T-tile), lanes = T
    # w_ref: (tn, C_in)   weight block (resident across the T axis)
    # b_ref: (tn, 1)      bias block
    # o_ref: (tn, tt)     output tile, lanes = T (lane-dense)
    acc = jnp.dot(w_ref[...], x_ref[...], preferred_element_type=jnp.float32)
    acc = acc + b_ref[...].astype(jnp.float32)
    o_ref[...] = acc.astype(o_ref.dtype)


def vampnet_embedding(latents, weight, bias, *, tile_t=1024):
    """Conv1d(kernel_size=1) forward: out[b,:,t] = W @ latents[b,:,t] + bias.

    latents: [B, C_in, T]   (C_in = n_codebooks * latent_dim)
    weight:  [d_model, C_in, 1] (PyTorch Conv1d layout) or [d_model, C_in]
    bias:    [d_model]
    returns: [B, d_model, T]
    """
    B, C_in, T = latents.shape
    if weight.ndim == 3:
        weight = weight[:, :, 0]
    d_model = weight.shape[0]
    assert weight.shape == (d_model, C_in)
    assert bias.shape == (d_model,)
    bias2d = bias.reshape(d_model, 1)

    # ---- T (lane) tile: full extent if it fits, else a multiple of 128 with a
    #      cdiv grid (ragged last tile handled by Pallas; no jnp.pad HBM pass).
    if T <= tile_t:
        tt = T
    else:
        tt = max(128, (tile_t // 128) * 128)

    # ---- d_model tile: weight/bias fully resident in the common case.  If the
    #      grid would be a single step (tiny B*T), split d_model so v7x's two
    #      TensorCores both get work.
    tn = d_model
    if B * pl.cdiv(T, tt) < 2 and d_model % 256 == 0:
        tn = d_model // 2
    n_j = d_model // tn

    # ---- VMEM plan: double-buffered tiles must fit comfortably on v7x (64 MiB/TC).
    itemsize = max(jnp.dtype(latents.dtype).itemsize, 4)  # f32-accumulate headroom

    def _footprint(tt_):
        return 2 * (C_in * tt_ + tn * C_in + tn + tn * tt_) * itemsize

    while _footprint(tt) > (40 << 20) and tt > 128:
        tt = 128 if tt <= 256 else max(128, ((tt // 2) // 128) * 128)
    n_t = pl.cdiv(T, tt)
    footprint = _footprint(tt)
    vmem_limit = int(max(min(footprint + (4 << 20), 48 << 20), 16 << 20))

    grid = (B, n_j, n_t)

    cost = pl.CostEstimate(
        flops=2 * B * T * d_model * C_in,
        transcendentals=0,
        bytes_accessed=jnp.dtype(latents.dtype).itemsize
        * (B * C_in * T + d_model * C_in + d_model + B * d_model * T),
    )

    return pl.pallas_call(
        _conv1x1_kernel,
        out_shape=jax.ShapeDtypeStruct((B, d_model, T), latents.dtype),
        grid_spec=pltpu.PrefetchScalarGridSpec(
            num_scalar_prefetch=0,
            grid=grid,
            in_specs=[
                # activations: one batch, full C_in, one T tile (lane axis = T)
                pl.BlockSpec((None, C_in, tt), lambda b, j, t: (b, 0, t)),
                # weight: constant block index across b/t -> DMA'd once, resident
                pl.BlockSpec((tn, C_in), lambda b, j, t: (j, 0)),
                # bias: resident
                pl.BlockSpec((tn, 1), lambda b, j, t: (j, 0)),
            ],
            out_specs=pl.BlockSpec((None, tn, tt), lambda b, j, t: (b, j, t)),
        ),
        compiler_params=pltpu.CompilerParams(
            dimension_semantics=("parallel", "parallel", "parallel"),
            vmem_limit_bytes=vmem_limit,
        ),
        cost_estimate=cost,
    )(latents, weight, bias2d)


if __name__ == "__main__":
    key = jax.random.PRNGKey(0)
    k1, k2, k3 = jax.random.split(key, 3)

    # Small shapes consistent with the module: C_in = n_codebooks * latent_dim.
    batch, n_codebooks, latent_dim, seq_len, d_model = 2, 4, 8, 256, 128
    c_in = n_codebooks * latent_dim

    latents = jax.random.normal(k1, (batch, c_in, seq_len), dtype=jnp.float32)

    # Deterministic Conv1d-style init (uniform in +/- 1/sqrt(fan_in)).
    bound = 1.0 / math.sqrt(c_in)
    weight = jax.random.uniform(
        k2, (d_model, c_in, 1), minval=-bound, maxval=bound, dtype=jnp.float32
    )
    bias = jax.random.uniform(
        k3, (d_model,), minval=-bound, maxval=bound, dtype=jnp.float32
    )

    out = jax.block_until_ready(vampnet_embedding(latents, weight, bias))

    # Reference: Conv1d(kernel_size=1) == channel-dim einsum + bias (exact precision).
    ref = (
        jnp.einsum(
            "dc,bct->bdt",
            weight[:, :, 0],
            latents,
            precision=jax.lax.Precision.HIGHEST,
        )
        + bias[None, :, None]
    )
    assert out.shape == (batch, d_model, seq_len)
    # Kernel uses default MXU precision (f32 accumulate); allow bf16-operand rounding.
    assert jnp.allclose(out, ref, atol=3e-2, rtol=3e-2), "mismatch vs reference"

    print("KERNEL_OK")
</pallas_src>

<mosaic_0001>
module attributes {stable_mosaic.version = 11 : i64} {
  func.func @_conv1x1_kernel(%arg0: i32, %arg1: i32, %arg2: i32, %arg3: memref<1x32x256xf32, #tpu.memory_space<vmem>>, %arg4: memref<128x32xf32, #tpu.memory_space<vmem>>, %arg5: memref<128x1xf32, #tpu.memory_space<vmem>>, %arg6: memref<1x128x256xf32, #tpu.memory_space<vmem>>) attributes {dimension_semantics = [#tpu.dimension_semantics<parallel>, #tpu.dimension_semantics<parallel>, #tpu.dimension_semantics<parallel>], iteration_bounds = array<i64: 2, 1, 1>, scalar_prefetch = 0 : i64, scratch_operands = 0 : i64, tpu.core_type = #tpu.core_type<tc>, window_params = [{transform_indices = @transform_0, window_bounds = array<i64: 1, 32, 256>}, {transform_indices = @transform_1, window_bounds = array<i64: 128, 32>}, {transform_indices = @transform_2, window_bounds = array<i64: 128, 1>}, {transform_indices = @transform_3, window_bounds = array<i64: 1, 128, 256>}]} {
    %c0 = arith.constant 0 : index
    %c0_0 = arith.constant 0 : index
    %0 = vector.load %arg4[%c0, %c0_0] : memref<128x32xf32, #tpu.memory_space<vmem>>, vector<128x32xf32>
    %c0_1 = arith.constant 0 : index
    %c0_2 = arith.constant 0 : index
    %c0_3 = arith.constant 0 : index
    %1 = vector.load %arg3[%c0_1, %c0_2, %c0_3] : memref<1x32x256xf32, #tpu.memory_space<vmem>>, vector<1x32x256xf32>
    %2 = vector.shape_cast %1 : vector<1x32x256xf32> to vector<32x256xf32>
    %cst = arith.constant dense<0.000000e+00> : vector<128x256xf32>
    %3 = tpu.matmul %0, %2, %cst {dimension_numbers = #tpu.dot_dimension_numbers<[1], [0], [0], [1], [0, 0, 1, 1], [], []>} : vector<128x32xf32>, vector<32x256xf32>, vector<128x256xf32> -> vector<128x256xf32>
    %c0_4 = arith.constant 0 : index
    %c0_5 = arith.constant 0 : index
    %4 = vector.load %arg5[%c0_4, %c0_5] : memref<128x1xf32, #tpu.memory_space<vmem>>, vector<128x1xf32>
    %5 = vector.broadcast %4 : vector<128x1xf32> to vector<128x256xf32>
    %6 = arith.addf %3, %5 : vector<128x256xf32>
    %c0_6 = arith.constant 0 : index
    %c0_7 = arith.constant 0 : index
    %c0_8 = arith.constant 0 : index
    %7 = vector.load %arg6[%c0_6, %c0_7, %c0_8] : memref<1x128x256xf32, #tpu.memory_space<vmem>>, vector<1x128x256xf32>
    %8 = vector.shape_cast %7 : vector<1x128x256xf32> to vector<128x256xf32>
    %9 = vector.shape_cast %6 : vector<128x256xf32> to vector<1x128x256xf32>
    tpu.vector_store %arg6[%c0_6, %c0_7, %c0_8], %9 {strides = array<i32>} : memref<1x128x256xf32, #tpu.memory_space<vmem>>, vector<1x128x256xf32>,
    return
  }
  func.func @transform_0(%arg0: i32, %arg1: i32, %arg2: i32) -> (i32, i32, i32) {
    %c0_i32 = arith.constant 0 : i32
    %c0_i32_0 = arith.constant 0 : i32
    return %arg0, %c0_i32, %arg2 : i32, i32, i32
  }
  func.func @transform_1(%arg0: i32, %arg1: i32, %arg2: i32) -> (i32, i32) {
    %c0_i32 = arith.constant 0 : i32
    %c0_i32_0 = arith.constant 0 : i32
    return %arg1, %c0_i32 : i32, i32
  }
  func.func @transform_2(%arg0: i32, %arg1: i32, %arg2: i32) -> (i32, i32) {
    %c0_i32 = arith.constant 0 : i32
    %c0_i32_0 = arith.constant 0 : i32
    return %arg1, %c0_i32 : i32, i32
  }
  func.func @transform_3(%arg0: i32, %arg1: i32, %arg2: i32) -> (i32, i32, i32) {
    %c0_i32 = arith.constant 0 : i32
    return %arg0, %arg1, %arg2 : i32, i32, i32
  }
}

</mosaic_0001>

<llo_original>
// kernel: tpu_custom_call.1
$region0: #{tpu_custom_call.1}
  #allocation0 [shape = 'u32[]', space=smem, size = 0x4, offset = 0x4, fixed_abs, tag = 'smem constant byte address 0x4 - core index']
  #allocation1 [shape = 'u32[72,128]{1,0:T(1,128)}', space=vmem, size = 0x9000, scoped, tag = 'internal scratch']
  %s0 = inlined_call_operand.vmem [shape: f32[2,32,256], index: 0, kind: input, shape index: {}]
  %s1 = inlined_call_operand.vmem [shape: f32[128,32], index: 1, kind: input, shape index: {}]
  %s2 = inlined_call_operand.vmem [shape: f32[128,1], index: 2, kind: input, shape index: {}]
  %s3 = inlined_call_operand.hbm [shape: f32[2,128,256], index: 3, kind: output, shape index: {}]
  %s4 = sld [smem:[#allocation0]]
  $region45: #{tpu_custom_call.1} parent=0
    _
  %s6 = ssub.s32 1, %s4
  %s7 = scalar_select 0, %s6, %s4
  $region1: #{tpu_custom_call.1} parent=0
    #allocation2 [shape = 'u8[262144]{0}', space=vmem, size = 0x40000, scoped, tag = 'output window, operand 0']
    #allocation3 [shape = 's32[2]{0}', space=sflag, size = 0x8, scoped, tag = 'scoped memory for tpu_custom_call.1']
    %8 = vsyncpa [#allocation3], 0
    %s9 = scalar_lea.sflag [#allocation3], 1
    %10 = vsyncpa %s9, 0
    loop: start=0, step=1, limit=4
    $region2: #{tpu_custom_call.1} parent=1 // loop_pre_header
      _
    $region3: #{tpu_custom_call.1} parent=1 // loop_header
      %s12 = sphi 0, %s16
      %p13 = scmp.ge.s32.totalorder %s12, 4
      %s19 = sphi 0, %s38
      %s20 = sphi 0, %s34
      %s21 = sphi 0, %s30
      %s22 = sphi 0, %s19
      %s23 = sphi 0, %s20
      %s24 = sphi 0, %s21
      %s25 = sphi 0, %s22
      %s26 = sphi 0, %s23
      %s27 = sphi 0, %s24
      %s43 = sphi 0, %s45
      %s46 = sphi 0, %s43
      %s47 = sphi 0, %s46
      %s63 = sphi 0, %s47
      %s69 = sphi 0, %s71
      %s72 = sphi 0, %s69
      %s73 = sphi 0, %s72
      %s89 = sphi 0, %s73
      %s95 = sphi 0, %s97
      %s98 = sphi 0, %s95
      %s99 = sphi 0, %s98
      %s115 = sphi 0, %s99
      %s125 = sphi 0, %s127
      %s128 = sphi 0, %s125
      %s129 = sphi 0, %s128
      %s145 = sphi 0, %s129
    $region4: #{tpu_custom_call.1} parent=1 // loop_header_branch
      %15 = sbr.rel (%p13) target = $region8
    $region5: #{tpu_custom_call.1} parent=1 // loop_body
      %s17 = ssub.s32 %s12, 1
      %s18 = ssub.s32 %s12, 2
      %s28 = sadd.s32 1, %s21
      %p29 = scmp.ge.s32.totalorder %s28, 1
      %s30 = scalar_select %p29, 0, %s28
      %s31 = sadd.s32 1, %s20
      %s32 = scalar_select %p29, %s31, %s20
      %p33 = scmp.ge.s32.totalorder %s32, 1
      %s34 = scalar_select %p33, 0, %s32
      %s35 = sadd.s32 1, %s19
      %s36 = scalar_select %p33, %s35, %s19
      %p37 = scmp.ge.s32.totalorder %s36, 2
      %s38 = scalar_select %p37, 0, %s36
      %s39 = ssub.s32 %s19, %s38
      %s40 = ssub.s32 %s21, %s30
      %s41 = sor.u32 %s39, %s40
      %p42 = scmp.eq.s32.totalorder %s41, 0
      %s44 = sadd.s32 %s43, 1
      %s45 = scalar_select %p42, %s43, %s44
      %p48 = pneg %p42
      %p49 = scmp.eq.s32.totalorder %s12, 1
      %p50 = por %p48, %p49
      %p51 = scmp.ne.s32.totalorder %s43, %s46
      %p52 = scmp.eq.s32.totalorder %s12, 0
      %p53 = por %p51, %p52
      %p54 = scmp.ne.s32.totalorder %s43, %s46
      %p55 = scmp.eq.s32.totalorder %s17, 1
      %p56 = por %p54, %p55
      %p57 = scmp.ne.s32.totalorder %s46, %s47
      %p58 = scmp.eq.s32.totalorder %s17, 0
      %p59 = por %p57, %p58
      %p60 = scmp.ne.s32.totalorder %s46, %s47
      %p61 = scmp.eq.s32.totalorder %s18, 1
      %p62 = por %p60, %p61
      %p64 = scmp.ne.s32.totalorder %s47, %s63
      %p65 = scmp.eq.s32.totalorder %s18, 0
      %p66 = por %p64, %p65
      %s67 = ssub.s32 %s20, %s34
      %p68 = scmp.eq.s32.totalorder %s67, 0
      %s70 = sadd.s32 %s69, 1
      %s71 = scalar_select %p68, %s69, %s70
      %p74 = pneg %p68
      %p75 = scmp.eq.s32.totalorder %s12, 1
      %p76 = por %p74, %p75
      %p77 = scmp.ne.s32.totalorder %s69, %s72
      %p78 = scmp.eq.s32.totalorder %s12, 0
      %p79 = por %p77, %p78
      %p80 = scmp.ne.s32.totalorder %s69, %s72
      %p81 = scmp.eq.s32.totalorder %s17, 1
      %p82 = por %p80, %p81
      %p83 = scmp.ne.s32.totalorder %s72, %s73
      %p84 = scmp.eq.s32.totalorder %s17, 0
      %p85 = por %p83, %p84
      %p86 = scmp.ne.s32.totalorder %s72, %s73
      %p87 = scmp.eq.s32.totalorder %s18, 1
      %p88 = por %p86, %p87
      %p90 = scmp.ne.s32.totalorder %s73, %s89
      %p91 = scmp.eq.s32.totalorder %s18, 0
      %p92 = por %p90, %p91
      %s93 = ssub.s32 %s20, %s34
      %p94 = scmp.eq.s32.totalorder %s93, 0
      %s96 = sadd.s32 %s95, 1
      %s97 = scalar_select %p94, %s95, %s96
      %p100 = pneg %p94
      %p101 = scmp.eq.s32.totalorder %s12, 1
      %p102 = por %p100, %p101
      %p103 = scmp.ne.s32.totalorder %s95, %s98
      %p104 = scmp.eq.s32.totalorder %s12, 0
      %p105 = por %p103, %p104
      %p106 = scmp.ne.s32.totalorder %s95, %s98
      %p107 = scmp.eq.s32.totalorder %s17, 1
      %p108 = por %p106, %p107
      %p109 = scmp.ne.s32.totalorder %s98, %s99
      %p110 = scmp.eq.s32.totalorder %s17, 0
      %p111 = por %p109, %p110
      %p112 = scmp.ne.s32.totalorder %s98, %s99
      %p113 = scmp.eq.s32.totalorder %s18, 1
      %p114 = por %p112, %p113
      %p116 = scmp.ne.s32.totalorder %s99, %s115
      %p117 = scmp.eq.s32.totalorder %s18, 0
      %p118 = por %p116, %p117
      %s119 = ssub.s32 %s19, %s38
      %s120 = ssub.s32 %s20, %s34
      %s121 = sor.u32 %s119, %s120
      %s122 = ssub.s32 %s21, %s30
      %s123 = sor.u32 %s121, %s122
      %p124 = scmp.eq.s32.totalorder %s123, 0
      %s126 = sadd.s32 %s125, 1
      %s127 = scalar_select %p124, %s125, %s126
      %p130 = pneg %p124
      %p131 = scmp.eq.s32.totalorder %s12, 1
      %p132 = por %p130, %p131
      %p133 = scmp.ne.s32.totalorder %s125, %s128
      %p134 = scmp.eq.s32.totalorder %s12, 0
      %p135 = por %p133, %p134
      %p136 = scmp.ne.s32.totalorder %s125, %s128
      %p137 = scmp.eq.s32.totalorder %s17, 1
      %p138 = por %p136, %p137
      %p139 = scmp.ne.s32.totalorder %s128, %s129
      %p140 = scmp.eq.s32.totalorder %s17, 0
      %p141 = por %p139, %p140
      %p142 = scmp.ne.s32.totalorder %s128, %s129
      %p143 = scmp.eq.s32.totalorder %s18, 1
      %p144 = por %p142, %p143
      %p146 = scmp.ne.s32.totalorder %s129, %s145
      %p147 = scmp.eq.s32.totalorder %s18, 0
      %p148 = por %p146, %p147
      %p149 = scmp.le.s32.totalorder 1, %s12
      %p150 = scmp.lt.s32.totalorder %s12, 3
      %p151 = pnand %p149, %p150
      %p152 = pneg %p151
      // Predicated region
      $region9: #{tpu_custom_call.1} parent=5 // pred_check
        _
      $region10: #{tpu_custom_call.1} parent=5 // pred_check_branch
        %154 = sbr.rel (%p151) target = $region12
      $region11: #{tpu_custom_call.1} parent=5 // pred_region
        %s155 = ssub.s32 %s12, 1
        // Predicated region
        $region13: #{tpu_custom_call.1} parent=11 // pred_check
          %p156 = pneg %p85
        $region14: #{tpu_custom_call.1} parent=11 // pred_check_branch
          %158 = sbr.rel (%p156) target = $region16
        $region15: #{tpu_custom_call.1} parent=11 // pred_region
          %s159 = smul.u32 16, %s23
          %p160 = scmp.lt.s32.totalorder %s159, 15
          %s161 = scalar_select %p160, %s159, 15
          %s162 = smul.addr %s161, 8
          %s163 = scalar_lea.vmem %s1, %s162
          %s164 = smul.u32 16, %s23
        $region16: #{tpu_custom_call.1} parent=11 // pred_fallthru
          _
        // Predicated region
        $region17: #{tpu_custom_call.1} parent=11 // pred_check
          %p165 = pneg %p111
        $region18: #{tpu_custom_call.1} parent=11 // pred_check_branch
          %167 = sbr.rel (%p165) target = $region20
        $region19: #{tpu_custom_call.1} parent=11 // pred_region
          %s168 = smul.u32 16, %s23
          %p169 = scmp.lt.s32.totalorder %s168, 15
          %s170 = scalar_select %p169, %s168, 15
          %s171 = smul.addr %s170, 8
          %s172 = scalar_lea.vmem %s2, %s171
          %s173 = smul.u32 16, %s23
        $region20: #{tpu_custom_call.1} parent=11 // pred_fallthru
          _
      $region12: #{tpu_custom_call.1} parent=5 // pred_fallthru
        _
      %p174 = scmp.lt.s32.totalorder %s12, 2
      // Predicated region
      $region21: #{tpu_custom_call.1} parent=5 // pred_check
        %p175 = pneg %p174
      $region22: #{tpu_custom_call.1} parent=5 // pred_check_branch
        %177 = sbr.rel (%p175) target = $region24
      $region23: #{tpu_custom_call.1} parent=5 // pred_region
        // Predicated region
        $region25: #{tpu_custom_call.1} parent=23 // pred_check
          %p178 = pneg %p53
        $region26: #{tpu_custom_call.1} parent=23 // pred_check_branch
          %180 = sbr.rel (%p178) target = $region28
        $region27: #{tpu_custom_call.1} parent=23 // pred_region
          %s181 = smul.u32 2, %s21
          %p182 = scmp.lt.s32.totalorder %s19, 1
          %s183 = scalar_select %p182, %s19, 1
          %p184 = scmp.lt.s32.totalorder %s181, 1
          %s185 = scalar_select %p184, %s181, 1
          %s186 = smul.addr %s183, 8
          %s187 = sadd.s32 %s185, %s186
          %s188 = smul.addr %s187, 8
          %s189 = scalar_lea.vmem %s0, %s188
          %s190 = smul.u32 2, %s21
        $region28: #{tpu_custom_call.1} parent=23 // pred_fallthru
          _
      $region24: #{tpu_custom_call.1} parent=5 // pred_fallthru
        _
      %p191 = scmp.le.s32.totalorder 1, %s12
      %p192 = scmp.lt.s32.totalorder %s12, 3
      %p193 = pnand %p191, %p192
      %p194 = pneg %p193
      // Predicated region
      $region29: #{tpu_custom_call.1} parent=5 // pred_check
        _
      $region30: #{tpu_custom_call.1} parent=5 // pred_check_branch
        %196 = sbr.rel (%p193) target = $region32
      $region31: #{tpu_custom_call.1} parent=5 // pred_region
        %s197 = ssub.s32 %s12, 1
        %s198 = smul.u32 2, %s24
        %p199 = scmp.lt.s32.totalorder %s22, 1
        %s200 = scalar_select %p199, %s22, 1
        %p201 = scmp.lt.s32.totalorder %s198, 1
        %s202 = scalar_select %p201, %s198, 1
        %s203 = smul.addr %s200, 8
        %s204 = sadd.s32 %s202, %s203
        %s205 = smul.addr %s204, 8
        %s206 = scalar_lea.vmem %s0, %s205
        %p207 = pneg %p59
        %p208 = pneg %p56
        %s209 = smul.u32 16, %s23
        %p210 = scmp.lt.s32.totalorder %s209, 15
        %s211 = scalar_select %p210, %s209, 15
        %s212 = smul.addr %s211, 8
        %s213 = scalar_lea.vmem %s1, %s212
        %p214 = pneg %p85
        %p215 = pneg %p82
        %s216 = smul.u32 16, %s23
        %p217 = scmp.lt.s32.totalorder %s216, 15
        %s218 = scalar_select %p217, %s216, 15
        %s219 = smul.addr %s218, 8
        %s220 = scalar_lea.vmem %s2, %s219
        %p221 = pneg %p111
        %p222 = pneg %p108
        %p223 = pneg %p141
        %p224 = pneg %p138
        %s225 = sand.u32 %s128, 1
        %s226 = scalar_lea.sflag [#allocation3], %s225
        %s227 = sand.u32 %s128, 1
        %s228 = smul.addr %s227, 256
        %s229 = scalar_lea.vmem [#allocation2], %s228
        %s230 = smul.u32 2, %s24
        %p231 = scmp.lt.s32.totalorder %s22, 1
        %s232 = scalar_select %p231, %s22, 1
        %p233 = scmp.lt.s32.totalorder %s230, 1
        %s234 = scalar_select %p233, %s230, 1
        %s235 = smul.addr %s232, 8
        %s236 = sadd.s32 %s234, %s235
        %s237 = smul.addr %s236, 8
        %s238 = scalar_lea.vmem %s0, %s237
        %s239 = smul.u32 2, %s24
        %s240 = smul.u32 16, %s23
        %p241 = scmp.lt.s32.totalorder %s240, 15
        %s242 = scalar_select %p241, %s240, 15
        %s243 = smul.addr %s242, 8
        %s244 = scalar_lea.vmem %s1, %s243
        %s245 = smul.u32 16, %s23
        %s246 = smul.u32 16, %s23
        %p247 = scmp.lt.s32.totalorder %s246, 15
        %s248 = scalar_select %p247, %s246, 15
        %s249 = smul.addr %s248, 8
        %s250 = scalar_lea.vmem %s2, %s249
        %s251 = smul.u32 16, %s23
        %s252 = smul.u32 16, %s23
        %s253 = smul.u32 2, %s24
        %v254 = vld [vmem:[%s244] sm:$0xff]
        %v255 = vld [vmem:[%s244 + $0x8] sm:$0xff]
        %v256 = vld [vmem:[%s244 + $0x10] sm:$0xff]
        %v257 = vld [vmem:[%s244 + $0x18] sm:$0xff]
        %v258 = vld [vmem:[%s244 + $0x20] sm:$0xff]
        %v259 = vld [vmem:[%s244 + $0x28] sm:$0xff]
        %v260 = vld [vmem:[%s244 + $0x30] sm:$0xff]
        %v261 = vld [vmem:[%s244 + $0x38] sm:$0xff]
        %v262 = vld [vmem:[%s244 + $0x40] sm:$0xff]
        %v263 = vld [vmem:[%s244 + $0x48] sm:$0xff]
        %v264 = vld [vmem:[%s244 + $0x50] sm:$0xff]
        %v265 = vld [vmem:[%s244 + $0x58] sm:$0xff]
        %v266 = vld [vmem:[%s244 + $0x60] sm:$0xff]
        %v267 = vld [vmem:[%s244 + $0x68] sm:$0xff]
        %v268 = vld [vmem:[%s244 + $0x70] sm:$0xff]
        %v269 = vld [vmem:[%s244 + $0x78] sm:$0xff]
        %v270 = vld [vmem:[%s238] sm:$0xff]
        %v271 = vld [vmem:[%s238 + $0x8] sm:$0xff]
        %v272 = vld [vmem:[%s238 + $0x10] sm:$0xff]
        %v273 = vld [vmem:[%s238 + $0x18] sm:$0xff]
        %v274 = vld [vmem:[%s238 + $0x20] sm:$0xff]
        %v275 = vld [vmem:[%s238 + $0x28] sm:$0xff]
        %v276 = vld [vmem:[%s238 + $0x30] sm:$0xff]
        %v277 = vld [vmem:[%s238 + $0x38] sm:$0xff]
        %v278 = vld [vmem:[%s250] sm:$0xff]
        %v279 = vld [vmem:[%s250 + $0x8] sm:$0xff]
        %v280 = vld [vmem:[%s250 + $0x10] sm:$0xff]
        %v281 = vld [vmem:[%s250 + $0x18] sm:$0xff]
        %v282 = vld [vmem:[%s250 + $0x20] sm:$0xff]
        %v283 = vld [vmem:[%s250 + $0x28] sm:$0xff]
        %v284 = vld [vmem:[%s250 + $0x30] sm:$0xff]
        %v285 = vld [vmem:[%s250 + $0x38] sm:$0xff]
        %v286 = vld [vmem:[%s250 + $0x40] sm:$0xff]
        %v287 = vld [vmem:[%s250 + $0x48] sm:$0xff]
        %v288 = vld [vmem:[%s250 + $0x50] sm:$0xff]
        %v289 = vld [vmem:[%s250 + $0x58] sm:$0xff]
        %v290 = vld [vmem:[%s250 + $0x60] sm:$0xff]
        %v291 = vld [vmem:[%s250 + $0x68] sm:$0xff]
        %v292 = vld [vmem:[%s250 + $0x70] sm:$0xff]
        %v293 = vld [vmem:[%s250 + $0x78] sm:$0xff]
        %295 = vset.pattern.permute.xlu0 0
        %296 = vperm.xlu0 %295, %v278
        %v297 = vpop.permute.xlu0 %296
        %300 = vset.pattern.permute.xlu0 0
        %301 = vperm.xlu0 %300, %v279
        %v302 = vpop.permute.xlu0 %301
        %305 = vset.pattern.permute.xlu0 0
        %306 = vperm.xlu0 %305, %v280
        %v307 = vpop.permute.xlu0 %306
        %310 = vset.pattern.permute.xlu0 0
        %311 = vperm.xlu0 %310, %v281
        %v312 = vpop.permute.xlu0 %311
        %315 = vset.pattern.permute.xlu0 0
        %316 = vperm.xlu0 %315, %v282
        %v317 = vpop.permute.xlu0 %316
        %320 = vset.pattern.permute.xlu0 0
        %321 = vperm.xlu0 %320, %v283
        %v322 = vpop.permute.xlu0 %321
        %325 = vset.pattern.permute.xlu0 0
        %326 = vperm.xlu0 %325, %v284
        %v327 = vpop.permute.xlu0 %326
        %330 = vset.pattern.permute.xlu0 0
        %331 = vperm.xlu0 %330, %v285
        %v332 = vpop.permute.xlu0 %331
        %335 = vset.pattern.permute.xlu0 0
        %336 = vperm.xlu0 %335, %v286
        %v337 = vpop.permute.xlu0 %336
        %340 = vset.pattern.permute.xlu0 0
        %341 = vperm.xlu0 %340, %v287
        %v342 = vpop.permute.xlu0 %341
        %345 = vset.pattern.permute.xlu0 0
        %346 = vperm.xlu0 %345, %v288
        %v347 = vpop.permute.xlu0 %346
        %350 = vset.pattern.permute.xlu0 0
        %351 = vperm.xlu0 %350, %v289
        %v352 = vpop.permute.xlu0 %351
        %355 = vset.pattern.permute.xlu0 0
        %356 = vperm.xlu0 %355, %v290
        %v357 = vpop.permute.xlu0 %356
        %360 = vset.pattern.permute.xlu0 0
        %361 = vperm.xlu0 %360, %v291
        %v362 = vpop.permute.xlu0 %361
        %365 = vset.pattern.permute.xlu0 0
        %366 = vperm.xlu0 %365, %v292
        %v367 = vpop.permute.xlu0 %366
        %370 = vset.pattern.permute.xlu0 0
        %371 = vperm.xlu0 %370, %v293
        %v372 = vpop.permute.xlu0 %371
        %vm374 = vcmask 261120
        %v376 = vsel %vm374, %v254, 0
        %v379 = vsel %vm374, %v255, 0
        %v382 = vsel %vm374, %v256, 0
        %v385 = vsel %vm374, %v257, 0
        %v388 = vsel %vm374, %v258, 0
        %v391 = vsel %vm374, %v259, 0
        %v394 = vsel %vm374, %v260, 0
        %v397 = vsel %vm374, %v261, 0
        %v400 = vsel %vm374, %v262, 0
        %v403 = vsel %vm374, %v263, 0
        %v406 = vsel %vm374, %v264, 0
        %v409 = vsel %vm374, %v265, 0
        %v412 = vsel %vm374, %v266, 0
        %v415 = vsel %vm374, %v267, 0
        %v418 = vsel %vm374, %v268, 0
        %v421 = vsel %vm374, %v269, 0
        %423 = vmatpush.msra.mxu0 0.0
        %424 = vmatpush.msra.mxu0 0.0
        %425 = vmatpush.msra.mxu0 0.0
        %426 = vmatpush.msra.mxu0 0.0
        %427 = vmatpush.msra.mxu0 0.0
        %428 = vmatpush.msra.mxu0 0.0
        %429 = vmatpush.msra.mxu0 0.0
        %430 = vmatpush.msra.mxu0 0.0
        %431 = vmatpush.msra.mxu0 0.0
        %432 = vmatpush.msra.mxu0 0.0
        %433 = vmatpush.msra.mxu0 0.0
        %434 = vmatpush.msra.mxu0 0.0
        %435 = vmatpush.msra.mxu0 %v276
        %436 = vmatpush.msra.mxu0 %v274
        %437 = vmatpush.msra.mxu0 %v272
        %438 = vmatpush.msra.mxu0 %v270
        %439 = vmatmul.f32.gmra.mxu0 %v376
        %v440 = vpop.f32.mrf.mxu0
        %v441 = vadd.f32 %v297, %v440
        %442 = vmatmul.f32.gmra.mxu0 %v379
        %v443 = vpop.f32.mrf.mxu0
        %v444 = vadd.f32 %v302, %v443
        %445 = vmatmul.f32.gmra.mxu0 %v382
        %v446 = vpop.f32.mrf.mxu0
        %v447 = vadd.f32 %v307, %v446
        %448 = vmatmul.f32.gmra.mxu0 %v385
        %v449 = vpop.f32.mrf.mxu0
        %v450 = vadd.f32 %v312, %v449
        %451 = vmatmul.f32.gmra.mxu0 %v388
        %v452 = vpop.f32.mrf.mxu0
        %v453 = vadd.f32 %v317, %v452
        %454 = vmatmul.f32.gmra.mxu0 %v391
        %v455 = vpop.f32.mrf.mxu0
        %v456 = vadd.f32 %v322, %v455
        %457 = vmatmul.f32.gmra.mxu0 %v394
        %v458 = vpop.f32.mrf.mxu0
        %v459 = vadd.f32 %v327, %v458
        %460 = vmatmul.f32.gmra.mxu0 %v397
        %v461 = vpop.f32.mrf.mxu0
        %v462 = vadd.f32 %v332, %v461
        %463 = vmatmul.f32.gmra.mxu0 %v400
        %v464 = vpop.f32.mrf.mxu0
        %v465 = vadd.f32 %v337, %v464
        %466 = vmatmul.f32.gmra.mxu0 %v403
        %v467 = vpop.f32.mrf.mxu0
        %v468 = vadd.f32 %v342, %v467
        %469 = vmatmul.f32.gmra.mxu0 %v406
        %v470 = vpop.f32.mrf.mxu0
        %v471 = vadd.f32 %v347, %v470
        %472 = vmatmul.f32.gmra.mxu0 %v409
        %v473 = vpop.f32.mrf.mxu0
        %v474 = vadd.f32 %v352, %v473
        %475 = vmatmul.f32.gmra.mxu0 %v412
        %v476 = vpop.f32.mrf.mxu0
        %v477 = vadd.f32 %v357, %v476
        %478 = vmatmul.f32.gmra.mxu0 %v415
        %v479 = vpop.f32.mrf.mxu0
        %v480 = vadd.f32 %v362, %v479
        %481 = vmatmul.f32.gmra.mxu0 %v418
        %v482 = vpop.f32.mrf.mxu0
        %v483 = vadd.f32 %v367, %v482
        %484 = vmatmul.f32.gmra.mxu0 %v421
        %v485 = vpop.f32.mrf.mxu0
        %v486 = vadd.f32 %v372, %v485
        %487 = vdwg.mxu0
        %488 = vmatpush.msra.mxu0 0.0
        %489 = vmatpush.msra.mxu0 0.0
        %490 = vmatpush.msra.mxu0 0.0
        %491 = vmatpush.msra.mxu0 0.0
        %492 = vmatpush.msra.mxu0 0.0
        %493 = vmatpush.msra.mxu0 0.0
        %494 = vmatpush.msra.mxu0 0.0
        %495 = vmatpush.msra.mxu0 0.0
        %496 = vmatpush.msra.mxu0 0.0
        %497 = vmatpush.msra.mxu0 0.0
        %498 = vmatpush.msra.mxu0 0.0
        %499 = vmatpush.msra.mxu0 0.0
        %500 = vmatpush.msra.mxu0 %v277
        %501 = vmatpush.msra.mxu0 %v275
        %502 = vmatpush.msra.mxu0 %v273
        %503 = vmatpush.msra.mxu0 %v271
        %504 = vmatmul.f32.gmra.mxu0 %v376
        %v505 = vpop.f32.mrf.mxu0
        %v506 = vadd.f32 %v297, %v505
        %507 = vmatmul.f32.gmra.mxu0 %v379
        %v508 = vpop.f32.mrf.mxu0
        %v509 = vadd.f32 %v302, %v508
        %510 = vmatmul.f32.gmra.mxu0 %v382
        %v511 = vpop.f32.mrf.mxu0
        %v512 = vadd.f32 %v307, %v511
        %513 = vmatmul.f32.gmra.mxu0 %v385
        %v514 = vpop.f32.mrf.mxu0
        %v515 = vadd.f32 %v312, %v514
        %516 = vmatmul.f32.gmra.mxu0 %v388
        %v517 = vpop.f32.mrf.mxu0
        %v518 = vadd.f32 %v317, %v517
        %519 = vmatmul.f32.gmra.mxu0 %v391
        %v520 = vpop.f32.mrf.mxu0
        %v521 = vadd.f32 %v322, %v520
        %522 = vmatmul.f32.gmra.mxu0 %v394
        %v523 = vpop.f32.mrf.mxu0
        %v524 = vadd.f32 %v327, %v523
        %525 = vmatmul.f32.gmra.mxu0 %v397
        %v526 = vpop.f32.mrf.mxu0
        %v527 = vadd.f32 %v332, %v526
        %528 = vmatmul.f32.gmra.mxu0 %v400
        %v529 = vpop.f32.mrf.mxu0
        %v530 = vadd.f32 %v337, %v529
        %531 = vmatmul.f32.gmra.mxu0 %v403
        %v532 = vpop.f32.mrf.mxu0
        %v533 = vadd.f32 %v342, %v532
        %534 = vmatmul.f32.gmra.mxu0 %v406
        %v535 = vpop.f32.mrf.mxu0
        %v536 = vadd.f32 %v347, %v535
        %537 = vmatmul.f32.gmra.mxu0 %v409
        %v538 = vpop.f32.mrf.mxu0
        %v539 = vadd.f32 %v352, %v538
        %540 = vmatmul.f32.gmra.mxu0 %v412
        %v541 = vpop.f32.mrf.mxu0
        %v542 = vadd.f32 %v357, %v541
        %543 = vmatmul.f32.gmra.mxu0 %v415
        %v544 = vpop.f32.mrf.mxu0
        %v545 = vadd.f32 %v362, %v544
        %546 = vmatmul.f32.gmra.mxu0 %v418
        %v547 = vpop.f32.mrf.mxu0
        %v548 = vadd.f32 %v367, %v547
        %549 = vmatmul.f32.gmra.mxu0 %v421
        %v550 = vpop.f32.mrf.mxu0
        %v551 = vadd.f32 %v372, %v550
        %552 = vdwg.mxu0
        %553 = vst [vmem:[%s229] sm:$0xff] %v441
        %554 = vst [vmem:[%s229 + $0x8] sm:$0xff] %v506
        %555 = vst [vmem:[%s229 + $0x10] sm:$0xff] %v444
        %556 = vst [vmem:[%s229 + $0x18] sm:$0xff] %v509
        %557 = vst [vmem:[%s229 + $0x20] sm:$0xff] %v447
        %558 = vst [vmem:[%s229 + $0x28] sm:$0xff] %v512
        %559 = vst [vmem:[%s229 + $0x30] sm:$0xff] %v450
        %560 = vst [vmem:[%s229 + $0x38] sm:$0xff] %v515
        %561 = vst [vmem:[%s229 + $0x40] sm:$0xff] %v453
        %562 = vst [vmem:[%s229 + $0x48] sm:$0xff] %v518
        %563 = vst [vmem:[%s229 + $0x50] sm:$0xff] %v456
        %564 = vst [vmem:[%s229 + $0x58] sm:$0xff] %v521
        %565 = vst [vmem:[%s229 + $0x60] sm:$0xff] %v459
        %566 = vst [vmem:[%s229 + $0x68] sm:$0xff] %v524
        %567 = vst [vmem:[%s229 + $0x70] sm:$0xff] %v462
        %568 = vst [vmem:[%s229 + $0x78] sm:$0xff] %v527
        %569 = vst [vmem:[%s229 + $0x80] sm:$0xff] %v465
        %570 = vst [vmem:[%s229 + $0x88] sm:$0xff] %v530
        %571 = vst [vmem:[%s229 + $0x90] sm:$0xff] %v468
        %572 = vst [vmem:[%s229 + $0x98] sm:$0xff] %v533
        %573 = vst [vmem:[%s229 + $0xa0] sm:$0xff] %v471
        %574 = vst [vmem:[%s229 + $0xa8] sm:$0xff] %v536
        %575 = vst [vmem:[%s229 + $0xb0] sm:$0xff] %v474
        %576 = vst [vmem:[%s229 + $0xb8] sm:$0xff] %v539
        %577 = vst [vmem:[%s229 + $0xc0] sm:$0xff] %v477
        %578 = vst [vmem:[%s229 + $0xc8] sm:$0xff] %v542
        %579 = vst [vmem:[%s229 + $0xd0] sm:$0xff] %v480
        %580 = vst [vmem:[%s229 + $0xd8] sm:$0xff] %v545
        %581 = vst [vmem:[%s229 + $0xe0] sm:$0xff] %v483
        %582 = vst [vmem:[%s229 + $0xe8] sm:$0xff] %v548
        %583 = vst [vmem:[%s229 + $0xf0] sm:$0xff] %v486
        %584 = vst [vmem:[%s229 + $0xf8] sm:$0xff] %v551
        %s585 = sand.u32 %s128, 1
        %s586 = scalar_lea.sflag [#allocation3], %s585
        %s587 = sand.u32 %s128, 1
        %s588 = smul.addr %s587, 256
        %s589 = scalar_lea.vmem [#allocation2], %s588
        // Predicated region
        $region33: #{tpu_custom_call.1} parent=31 // pred_check
          %p590 = pneg %p138
        $region34: #{tpu_custom_call.1} parent=31 // pred_check_branch
          %592 = sbr.rel (%p590) target = $region36
        $region35: #{tpu_custom_call.1} parent=31 // pred_region
          %s593 = smul.u32 16, %s23
          %s594 = smul.u32 2, %s24
          %596 = vsyncadd %s586, 0
          %s597 = smul.addr %s593, 2
          %s598 = sadd.s32 %s594, %s597
          %s599 = smul.addr %s22, 32
          %s600 = sadd.s32 %s598, %s599
          %s601 = smul.addr %s600, 8
          %s602 = scalar_lea.hbm %s3, %s601
          %s603 = sshll.u32 %s589, 4
          %s604 = int_to_ptr.vmem [resolvable:$true] %s603
          %s605 = sshll.u32 %s602, 4
          %s606 = int_to_ptr.hbm [resolvable:$true] %s605
          %611 = dma.vmem_to_hbm [thread:$0]  %s604, 4096, %s606, %s586, 256, 256, 16
        $region36: #{tpu_custom_call.1} parent=31 // pred_fallthru
          _
      $region32: #{tpu_custom_call.1} parent=5 // pred_fallthru
        _
      %p612 = scmp.le.s32.totalorder 2, %s12
      // Predicated region
      $region37: #{tpu_custom_call.1} parent=5 // pred_check
        %p613 = pneg %p612
      $region38: #{tpu_custom_call.1} parent=5 // pred_check_branch
        %615 = sbr.rel (%p613) target = $region40
      $region39: #{tpu_custom_call.1} parent=5 // pred_region
        %s616 = ssub.s32 %s12, 2
        // Predicated region
        $region41: #{tpu_custom_call.1} parent=39 // pred_check
          %p617 = pneg %p144
        $region42: #{tpu_custom_call.1} parent=39 // pred_check_branch
          %619 = sbr.rel (%p617) target = $region44
        $region43: #{tpu_custom_call.1} parent=39 // pred_region
          %s620 = sand.u32 %s129, 1
          %s621 = scalar_lea.sflag [#allocation3], %s620
          %s622 = sand.u32 %s129, 1
          %s623 = smul.addr %s622, 256
          %s624 = scalar_lea.vmem [#allocation2], %s623
          %626 = dma.done %s621, 4096
        $region44: #{tpu_custom_call.1} parent=39 // pred_fallthru
          _
      $region40: #{tpu_custom_call.1} parent=5 // pred_fallthru
        _
    $region6: #{tpu_custom_call.1} parent=1 // loop_footer
      %s16 = sadd.s32 1, %s12
    $region7: #{tpu_custom_call.1} parent=1 // loop_footer_branch
      %11 = sbr.rel target = $region3
    $region8: #{tpu_custom_call.1} parent=1 // loop_exit
      _
    %627 = vsyncpa [#allocation3], 1
    %s628 = scalar_lea.sflag [#allocation3], 1
    %629 = vsyncpa %s628, 1

</llo_original>
